<compile_context>
chip_gen: v5e
topology: v5e:2x2
jax: 0.10.0
libtpu: 0.0.40
codegen_flags: <defaults>
</compile_context>

<pallas_src>
import functools

import jax
import jax.numpy as jnp
from jax.experimental import pallas as pl
from jax.experimental.pallas import tpu as pltpu


def _ptelu_kernel(alpha_ref, beta_ref, x_ref, o_ref, *, compute_dtype):
    alpha = alpha_ref[0, 0].astype(compute_dtype)
    beta = beta_ref[0, 0].astype(compute_dtype)
    xc = x_ref[...].astype(compute_dtype)
    # Clamp: tanh(exp(t)) == 1.0 to machine precision for t >= ~20, so the
    # clamp is exact and avoids overflow to +inf for large alpha*x.
    t = jnp.tanh(jnp.exp(jnp.minimum(alpha * xc, compute_dtype(20.0))))
    o_ref[...] = (beta * xc * t).astype(o_ref.dtype)


@functools.lru_cache(maxsize=None)
def _tpu_tuning():
    """(per-input-tile target bytes, has bf16 EUP) for the local TPU generation."""
    try:
        kind = jax.devices()[0].device_kind.lower()
    except Exception:  # pragma: no cover - defensive default
        kind = ""
    is_v7 = ("v7" in kind) or ("7x" in kind)
    has_bf16_eup = is_v7 or ("v6" in kind)
    # v7x: ~3.2 TB/s HBM makes per-grid-step overhead a larger fraction; 4 MiB
    # tiles keep resident VMEM (4x tile + temps) within ~32 MiB of 64 MiB VMEM.
    tile_target = (4 << 20) if is_v7 else (2 << 20)
    return tile_target, has_bf16_eup


def _layout(total, itemsize, tile_target_bytes):
    """Pick (lane_w, rows, block_rows) for a flat stream. `total % 128 == 0`."""
    for lane_w in (4096, 2048, 1024, 512, 256, 128):
        if total % lane_w == 0:
            break
    rows = total // lane_w
    sub = {4: 8, 2: 16, 1: 32}.get(itemsize, 8)  # minimal sublane multiple

    if rows <= sub:
        return lane_w, rows, rows  # full-extent block (always legal)

    target_rows = max(sub, tile_target_bytes // (lane_w * itemsize))
    block_rows = max(sub, (min(rows, target_rows) // sub) * sub)
    # Guarantee >= 2 grid steps so ("parallel",) can use both v7x TensorCores.
    half_rows = max(sub, (rows // (2 * sub)) * sub)
    block_rows = min(block_rows, half_rows)
    return lane_w, rows, block_rows


def _ptelu_pallas_2d(x2d, alpha_arr, beta_arr, block_rows, lane_w, compute_dtype):
    rows = x2d.shape[0]
    itemsize = x2d.dtype.itemsize
    tile_elems = block_rows * lane_w

    # VMEM budget: double-buffered input + output tiles, ~3 live elementwise
    # temporaries in the compute dtype, plus fixed headroom. Cap at 32 MiB so
    # we never claim all of v7x's 64 MiB physical VMEM.
    io_bytes = 2 * 2 * tile_elems * itemsize
    tmp_bytes = 3 * tile_elems * jnp.dtype(compute_dtype).itemsize
    vmem_limit = int(min(max(io_bytes + tmp_bytes + (2 << 20), 8 << 20), 32 << 20))

    kernel = functools.partial(_ptelu_kernel, compute_dtype=compute_dtype)
    grid = (pl.cdiv(rows, block_rows),)

    return pl.pallas_call(
        kernel,
        out_shape=jax.ShapeDtypeStruct((rows, lane_w), x2d.dtype),
        grid_spec=pltpu.PrefetchScalarGridSpec(
            num_scalar_prefetch=0,
            grid=grid,
            in_specs=[
                pl.BlockSpec(memory_space=pltpu.MemorySpace.SMEM),  # alpha (1,1)
                pl.BlockSpec(memory_space=pltpu.MemorySpace.SMEM),  # beta  (1,1)
                pl.BlockSpec((block_rows, lane_w), lambda i: (i, 0)),
            ],
            out_specs=pl.BlockSpec((block_rows, lane_w), lambda i: (i, 0)),
        ),
        compiler_params=pltpu.CompilerParams(
            dimension_semantics=("parallel",),
            vmem_limit_bytes=vmem_limit,
        ),
    )(alpha_arr, beta_arr, x2d)


def _ptelu_jnp(x, alpha, beta, out_dtype):
    xf = x.astype(jnp.float32)
    y = beta * xf * jnp.tanh(jnp.exp(jnp.minimum(alpha * xf, jnp.float32(20.0))))
    return y.astype(out_dtype)


@jax.jit
def ptelu(x, alpha, beta):
    """PTeLU elementwise activation: beta * x * tanh(exp(alpha * x))."""
    orig_shape, orig_dtype = x.shape, x.dtype
    total = x.size
    itemsize = x.dtype.itemsize

    tile_target, has_bf16_eup = _tpu_tuning()
    # bf16 exp/tanh on v6e/v7x halves EUP pushes (single EUP slot is the
    # potential binder for bf16 I/O); keep f32 compute on v5e / f32 inputs.
    compute_dtype = (
        jnp.bfloat16 if (orig_dtype == jnp.bfloat16 and has_bf16_eup) else jnp.float32
    )

    alpha_arr = jnp.asarray(alpha, jnp.float32).reshape(1, 1)
    beta_arr = jnp.asarray(beta, jnp.float32).reshape(1, 1)

    x_flat = x.reshape(-1)
    rem = total % 128
    main = total - rem

    pieces = []
    if main:
        lane_w, rows, block_rows = _layout(main, itemsize, tile_target)
        x2d = x_flat[:main].reshape(rows, lane_w)  # contiguous prefix, lane-dense
        out2d = _ptelu_pallas_2d(x2d, alpha_arr, beta_arr, block_rows, lane_w, compute_dtype)
        pieces.append(out2d.reshape(-1))
    if rem:
        # <128-element tail computed with plain jnp instead of padding/slicing
        # the whole tensor (avoids ~2 extra full-tensor HBM passes).
        # TODO(synk): could fold the tail into the kernel with an in-kernel
        # masked final row if the tiny split/concat ever shows up in profiles.
        pieces.append(_ptelu_jnp(x_flat[main:], alpha_arr[0, 0], beta_arr[0, 0], orig_dtype))

    out_flat = pieces[0] if len(pieces) == 1 else jnp.concatenate(pieces)
    return out_flat.reshape(orig_shape)


def ptelu_ref(x, alpha, beta):
    xf = x.astype(jnp.float32)
    y = beta * xf * jnp.tanh(jnp.exp(jnp.minimum(alpha * xf, 20.0)))
    return y.astype(x.dtype)


if __name__ == "__main__":
    key0, key1 = jax.random.split(jax.random.PRNGKey(0), 2)

    # PTeLU(alpha=1.0, beta=1.0, learnable=False) -> deterministic scalar params.
    alpha, beta = 1.0, 1.0

    # MobileNetV4-style NCHW activation (128-aligned element count -> pure kernel path).
    x = jax.random.normal(key0, (2, 4, 16, 16), dtype=jnp.float32)
    y = jax.block_until_ready(ptelu(x, alpha, beta))
    y_ref = ptelu_ref(x, alpha, beta)
    assert y.shape == x.shape and y.dtype == x.dtype
    assert jnp.allclose(y, y_ref, atol=1e-5, rtol=1e-5), "mismatch vs reference (aligned)"

    # Ragged element count (not a multiple of 128) -> kernel prefix + jnp tail path.
    x2 = jax.random.normal(key1, (2, 3, 5, 7), dtype=jnp.float32)
    y2 = jax.block_until_ready(ptelu(x2, alpha, beta))
    assert y2.shape == x2.shape and y2.dtype == x2.dtype
    assert jnp.allclose(y2, ptelu_ref(x2, alpha, beta), atol=1e-5, rtol=1e-5), (
        "mismatch vs reference (ragged)"
    )

    print("KERNEL_OK")
</pallas_src>

<mosaic_0001>
module attributes {stable_mosaic.version = 11 : i64} {
  func.func @_ptelu_kernel(%arg0: i32, %arg1: memref<1x1xf32, #tpu.memory_space<smem>>, %arg2: memref<1x1xf32, #tpu.memory_space<smem>>, %arg3: memref<1x2048xf32, #tpu.memory_space<vmem>>, %arg4: memref<1x2048xf32, #tpu.memory_space<vmem>>) attributes {dimension_semantics = [#tpu.dimension_semantics<parallel>], iteration_bounds = array<i64: 1>, scalar_prefetch = 0 : i64, scratch_operands = 0 : i64, tpu.core_type = #tpu.core_type<tc>, window_params = [{transform_indices = @transform_0, window_bounds = array<i64: 1, 1>}, {transform_indices = @transform_1, window_bounds = array<i64: 1, 1>}, {transform_indices = @transform_2, window_bounds = array<i64: 1, 2048>}, {transform_indices = @transform_3, window_bounds = array<i64: 1, 2048>}]} {
    %c0 = arith.constant 0 : index
    %c0_0 = arith.constant 0 : index
    %0 = memref.load %arg1[%c0, %c0_0] : memref<1x1xf32, #tpu.memory_space<smem>>
    %c0_1 = arith.constant 0 : index
    %c0_2 = arith.constant 0 : index
    %1 = memref.load %arg2[%c0_1, %c0_2] : memref<1x1xf32, #tpu.memory_space<smem>>
    %c0_3 = arith.constant 0 : index
    %c0_4 = arith.constant 0 : index
    %2 = vector.load %arg3[%c0_3, %c0_4] : memref<1x2048xf32, #tpu.memory_space<vmem>>, vector<1x2048xf32>
    %3 = vector.broadcast %0 : f32 to vector<1x2048xf32>
    %4 = arith.mulf %3, %2 : vector<1x2048xf32>
    %cst = arith.constant 2.000000e+01 : f32
    %5 = vector.broadcast %cst : f32 to vector<1x2048xf32>
    %6 = arith.minimumf %4, %5 : vector<1x2048xf32>
    %7 = math.exp %6 : vector<1x2048xf32>
    %8 = math.tanh %7 : vector<1x2048xf32>
    %9 = vector.broadcast %1 : f32 to vector<1x2048xf32>
    %10 = arith.mulf %9, %2 : vector<1x2048xf32>
    %11 = arith.mulf %10, %8 : vector<1x2048xf32>
    %c0_5 = arith.constant 0 : index
    %c0_6 = arith.constant 0 : index
    %12 = vector.load %arg4[%c0_5, %c0_6] : memref<1x2048xf32, #tpu.memory_space<vmem>>, vector<1x2048xf32>
    tpu.vector_store %arg4[%c0_5, %c0_6], %11 {strides = array<i32>} : memref<1x2048xf32, #tpu.memory_space<vmem>>, vector<1x2048xf32>,
    return
  }
  func.func @transform_0(%arg0: i32) -> (i32, i32) {
    %c0_i32 = arith.constant 0 : i32
    %c0_i32_0 = arith.constant 0 : i32
    %c0_i32_1 = arith.constant 0 : i32
    return %c0_i32, %c0_i32_0 : i32, i32
  }
  func.func @transform_1(%arg0: i32) -> (i32, i32) {
    %c0_i32 = arith.constant 0 : i32
    %c0_i32_0 = arith.constant 0 : i32
    %c0_i32_1 = arith.constant 0 : i32
    return %c0_i32, %c0_i32_0 : i32, i32
  }
  func.func @transform_2(%arg0: i32) -> (i32, i32) {
    %c0_i32 = arith.constant 0 : i32
    %c0_i32_0 = arith.constant 0 : i32
    return %arg0, %c0_i32 : i32, i32
  }
  func.func @transform_3(%arg0: i32) -> (i32, i32) {
    %c0_i32 = arith.constant 0 : i32
    %c0_i32_0 = arith.constant 0 : i32
    return %arg0, %c0_i32 : i32, i32
  }
}

</mosaic_0001>

<llo_original>
// kernel: ptelu.1
$region0: #{ptelu.1}
  #allocation0 [shape = 'u32[]', space=smem, size = 0x4, offset = 0x4, fixed_abs, tag = 'smem constant byte address 0x4 - core index']
  #allocation1 [shape = 'u32[72,128]{1,0:T(1,128)}', space=vmem, size = 0x9000, scoped, tag = 'internal scratch']
  #allocation2 [shape = 'f32[1,1]{1,0:T(1,128)S(6)}', space=smem, size = 0x200, scoped, tag = 'scoped memory for ptelu.1']
  #allocation3 [shape = 'f32[1,1]{1,0:T(1,128)S(6)}', space=smem, size = 0x200, scoped, tag = 'scoped memory for ptelu.1']
  %s0 = inlined_call_operand.<no memory space> [shape: f32[1,1], index: 0, kind: input, shape index: {}]
  %s1 = inlined_call_operand.<no memory space> [shape: f32[1,1], index: 1, kind: input, shape index: {}]
  %s2 = inlined_call_operand.vmem [shape: f32[1,2048], index: 2, kind: input, shape index: {}]
  %s3 = inlined_call_operand.vmem [shape: f32[1,2048], index: 3, kind: output, shape index: {}]
  %s4 = sld [smem:[#allocation0]]
  $region22: #{ptelu.1} parent=0
    _
  %s6 = ssub.s32 1, %s4
  %s7 = scalar_select 0, %s6, %s4
  %8 = sst [smem:[#allocation2]] %s0
  %9 = sst [smem:[#allocation3]] %s1
  // Predicated region
  $region2: #{ptelu.1} parent=0 // pred_check
    _
  $region3: #{ptelu.1} parent=0 // pred_check_branch
    %11 = sbr.rel (0) target = $region5
  $region4: #{ptelu.1} parent=0 // pred_region
    _
  $region5: #{ptelu.1} parent=0 // pred_fallthru
    _
  // Predicated region
  $region6: #{ptelu.1} parent=0 // pred_check
    _
  $region7: #{ptelu.1} parent=0 // pred_check_branch
    %13 = sbr.rel (0) target = $region9
  $region8: #{ptelu.1} parent=0 // pred_region
    _
  $region9: #{ptelu.1} parent=0 // pred_fallthru
    _
  // Predicated region
  $region10: #{ptelu.1} parent=0 // pred_check
    _
  $region11: #{ptelu.1} parent=0 // pred_check_branch
    %15 = sbr.rel (0) target = $region13
  $region12: #{ptelu.1} parent=0 // pred_region
    _
  $region13: #{ptelu.1} parent=0 // pred_fallthru
    _
  %s16 = sld [smem:[#allocation2]]
  %s17 = sld [smem:[#allocation3]]
  %v18 = vld [vmem:[%s2] sm:$0xff]
  %v19 = vld [vmem:[%s2 + $0x8] sm:$0xff]
  %v20 = vstv %s16
  %v21 = vmul.f32 %v20, %v18
  %v22 = vmul.f32 %v20, %v19
  %v23 = vmin.f32 %v21, 20.0
  %v24 = vmin.f32 %v22, 20.0
  %v25 = vmul.f32 %v23, 1.442695
  %v26 = vpow.pop %v25
  %v27 = vmul.f32 %v24, 1.442695
  %v28 = vpow.pop %v27
  %v29 = vtanh.pop %v26
  %v30 = vtanh.pop %v28
  %v31 = vstv %s17
  %v32 = vmul.f32 %v31, %v18
  %v33 = vmul.f32 %v31, %v19
  %v34 = vmul.f32 %v32, %v29
  %v35 = vmul.f32 %v33, %v30
  %36 = vst [vmem:[%s3] sm:$0xff] %v34
  %37 = vst [vmem:[%s3 + $0x8] sm:$0xff] %v35
  // Predicated region
  $region14: #{ptelu.1} parent=0 // pred_check
    _
  $region15: #{ptelu.1} parent=0 // pred_check_branch
    %39 = sbr.rel (0) target = $region17
  $region16: #{ptelu.1} parent=0 // pred_region
    _
  $region17: #{ptelu.1} parent=0 // pred_fallthru
    _
  // Predicated region
  $region18: #{ptelu.1} parent=0 // pred_check
    _
  $region19: #{ptelu.1} parent=0 // pred_check_branch
    %41 = sbr.rel (0) target = $region21
  $region20: #{ptelu.1} parent=0 // pred_region
    _
  $region21: #{ptelu.1} parent=0 // pred_fallthru
    _

</llo_original>
